<compile_context>
chip_gen: v7x
topology: tpu7x:2x2x1
jax: 0.10.0
libtpu: 0.0.40
codegen_flags: <defaults>
</compile_context>

<pallas_src>
import math

import jax
import jax.numpy as jnp
from jax.experimental import pallas as pl
from jax.experimental.pallas import tpu as pltpu

HIDDEN = 256
LN_EPS = 1e-5
TILE_B_MAX = 1024                       # larger tiles amortize per-grid-step overhead (v6e data)
VMEM_LIMIT_BYTES = 32 * 1024 * 1024     # raise v5e's 16 MiB default; safe on v6e/v7x
VMEM_BUDGET_BYTES = 20 * 1024 * 1024    # budget for pipelined buffers; rest = compiler temps


def _round_up(x, m):
    return (x + m - 1) // m * m


def _choose_tile_b(B, F, O, w_bytes):
    """Batch-tile size: VMEM-budget aware; >=2 grid steps for v7x megacore."""
    if B <= 8:
        return B  # single block equal to the full batch dim (valid tiling)
    f_lane = _round_up(F, 128)  # lane width the x tile occupies in VMEM
    o_lane = _round_up(O, 128)  # lane width the out tile occupies in VMEM
    # Resident weights/biases (assume the pipeline still double-buffers them
    # even though their index_map is constant).
    fixed = 2 * w_bytes * (f_lane * HIDDEN + HIDDEN * o_lane)
    fixed += 2 * 4 * (3 * HIDDEN + o_lane)
    # Per batch-row: double-buffered f32 x/out tiles + ~4 live f32 copies of
    # the (tile_b, 256) intermediates.
    per_row = 2 * 4 * f_lane + 2 * 4 * o_lane + 4 * 4 * HIDDEN
    avail = VMEM_BUDGET_BYTES - fixed
    vmem_cap = max(8, (avail // per_row) // 8 * 8) if avail > 0 else 8
    # Aim for >=2 grid steps so the "parallel" batch axis can shard across the
    # two TensorCores on v7x (harmless on v5e/v6e).
    split = _round_up(pl.cdiv(B, 2), 8)
    return int(max(8, min(TILE_B_MAX, vmem_cap, split)))


def wav_layer_kernel(x_ref, w1_ref, b1_ref, g_ref, beta_ref, w2_ref, b2_ref, out_ref):
    # den1: (TB, F) @ (F, 256) + b1.  Cast the x tile to the weight dtype (bf16
    # in the fast path) so the MXU runs native-rate; accumulate in f32.
    x = x_ref[...].astype(w1_ref.dtype)
    h = jnp.dot(x, w1_ref[...], preferred_element_type=jnp.float32) + b1_ref[...]
    # TODO(synk): nn.Dropout is stochastic in train mode; implemented as identity (eval mode).
    # ReLU
    h = jnp.maximum(h, 0.0)
    # LayerNorm over last dim (256): one-pass mean/var (E[x^2] - E[x]^2), biased
    # variance like nn.LayerNorm.  h is post-ReLU and bounded -> stable in f32.
    inv_n = 1.0 / HIDDEN
    s = jnp.sum(h, axis=-1, keepdims=True)
    ss = jnp.sum(h * h, axis=-1, keepdims=True)
    mean = s * inv_n
    var = ss * inv_n - mean * mean
    h_norm = (h - mean) * jax.lax.rsqrt(var + LN_EPS)
    h_norm = h_norm * g_ref[...] + beta_ref[...]
    # den2: (TB, 256) @ (256, O) + b2 -> unpadded store (O small; bytes tiny).
    out_ref[...] = (
        jnp.dot(h_norm.astype(w2_ref.dtype), w2_ref[...], preferred_element_type=jnp.float32)
        + b2_ref[...]
    ).astype(out_ref.dtype)


def wav_layer_forward(x, params, *, use_bf16_matmul=True):
    """x: (B, in_channels, 3) float32. Returns (B, out_channels) float32."""
    B = x.shape[0]
    x2d = x.reshape(B, -1)  # torch.reshape(x, (x.size(0), -1))
    w1, b1, gamma, beta, w2, b2 = params
    F = x2d.shape[1]
    O = w2.shape[1]
    assert w1.shape == (F, HIDDEN)

    # MXU operand dtype: bf16 (fast, ~1e-2 accuracy) or f32 (exact parity).
    mxu_dtype = jnp.bfloat16 if use_bf16_matmul else x2d.dtype
    w1m = w1.astype(mxu_dtype)
    w2m = w2.astype(mxu_dtype)

    tile_b = _choose_tile_b(B, F, O, jnp.dtype(mxu_dtype).itemsize)
    grid = (pl.cdiv(B, tile_b),)  # partial edge block handled (masked) by Pallas

    const = lambda shape: pl.BlockSpec(shape, lambda i: tuple(0 for _ in shape))
    out = pl.pallas_call(
        wav_layer_kernel,
        out_shape=jax.ShapeDtypeStruct((B, O), jnp.float32),
        grid_spec=pl.GridSpec(
            grid=grid,
            in_specs=[
                pl.BlockSpec((tile_b, F), lambda i: (i, 0)),  # x: batch-tiled, unpadded F
                const((F, HIDDEN)),  # weights/biases stay VMEM-resident (constant index_map)
                const((1, HIDDEN)),
                const((1, HIDDEN)),
                const((1, HIDDEN)),
                const((HIDDEN, O)),
                const((1, O)),
            ],
            out_specs=pl.BlockSpec((tile_b, O), lambda i: (i, 0)),  # unpadded output
        ),
        compiler_params=pltpu.CompilerParams(
            dimension_semantics=("parallel",),     # megacore sharding on v7x
            vmem_limit_bytes=VMEM_LIMIT_BYTES,     # explicit scoped-VMEM headroom (v5e)
        ),
    )(x2d, w1m, b1, gamma, beta, w2m, b2)

    return out


def init_params(key, in_channels, out_channels):
    """Deterministic init mirroring nn.Linear / nn.LayerNorm parameter shapes."""
    F = in_channels * 3
    k1, k2, k3, k4 = jax.random.split(key, 4)
    lim1 = 1.0 / math.sqrt(F)
    lim2 = 1.0 / math.sqrt(HIDDEN)
    w1 = jax.random.uniform(k1, (F, HIDDEN), jnp.float32, -lim1, lim1)
    b1 = jax.random.uniform(k2, (1, HIDDEN), jnp.float32, -lim1, lim1)
    gamma = jnp.ones((1, HIDDEN), jnp.float32)
    beta = jnp.zeros((1, HIDDEN), jnp.float32)
    w2 = jax.random.uniform(k3, (HIDDEN, out_channels), jnp.float32, -lim2, lim2)
    b2 = jax.random.uniform(k4, (1, out_channels), jnp.float32, -lim2, lim2)
    return (w1, b1, gamma, beta, w2, b2)


def reference_forward(x, params):
    """Plain-JAX f32 reference for correctness check."""
    w1, b1, gamma, beta, w2, b2 = params
    x2d = x.reshape(x.shape[0], -1)
    h = x2d @ w1 + b1
    h = jnp.maximum(h, 0.0)
    mean = jnp.mean(h, axis=-1, keepdims=True)
    var = jnp.mean((h - mean) ** 2, axis=-1, keepdims=True)
    hn = (h - mean) / jnp.sqrt(var + LN_EPS) * gamma + beta
    return hn @ w2 + b2


if __name__ == "__main__":
    key = jax.random.PRNGKey(0)
    kx, kp = jax.random.split(key)

    batch = 4
    in_channels = 32
    out_channels = 8

    x = jax.random.normal(kx, (batch, in_channels, 3), jnp.float32)
    params = init_params(kp, in_channels, out_channels)

    ref = reference_forward(x, params)

    # Exact-f32 path: tight parity with the reference.
    out_f32 = jax.block_until_ready(wav_layer_forward(x, params, use_bf16_matmul=False))
    assert out_f32.shape == (batch, out_channels), out_f32.shape
    assert jnp.allclose(out_f32, ref, atol=1e-4, rtol=1e-4), float(jnp.max(jnp.abs(out_f32 - ref)))

    # Default fast path: bf16 MXU operands, f32 accumulation -> relaxed tolerance.
    out_bf16 = jax.block_until_ready(wav_layer_forward(x, params))
    assert out_bf16.shape == (batch, out_channels), out_bf16.shape
    assert jnp.allclose(out_bf16, ref, atol=5e-2, rtol=5e-2), float(jnp.max(jnp.abs(out_bf16 - ref)))

    print("KERNEL_OK")
</pallas_src>

<mosaic_0001>
module attributes {stable_mosaic.version = 11 : i64} {
  func.func @wav_layer_kernel(%arg0: i32, %arg1: memref<4x96xf32, #tpu.memory_space<vmem>>, %arg2: memref<96x256xf32, #tpu.memory_space<vmem>>, %arg3: memref<1x256xf32, #tpu.memory_space<vmem>>, %arg4: memref<1x256xf32, #tpu.memory_space<vmem>>, %arg5: memref<1x256xf32, #tpu.memory_space<vmem>>, %arg6: memref<256x8xf32, #tpu.memory_space<vmem>>, %arg7: memref<1x8xf32, #tpu.memory_space<vmem>>, %arg8: memref<4x8xf32, #tpu.memory_space<vmem>>) attributes {dimension_semantics = [#tpu.dimension_semantics<parallel>], iteration_bounds = array<i64: 1>, scalar_prefetch = 0 : i64, scratch_operands = 0 : i64, tpu.core_type = #tpu.core_type<tc>, window_params = [{transform_indices = @transform_0, window_bounds = array<i64: 4, 96>}, {pipeline_mode = #tpu.pipeline_mode<synchronous>, transform_indices = @transform_1, window_bounds = array<i64: 96, 256>}, {pipeline_mode = #tpu.pipeline_mode<synchronous>, transform_indices = @transform_2, window_bounds = array<i64: 1, 256>}, {pipeline_mode = #tpu.pipeline_mode<synchronous>, transform_indices = @transform_3, window_bounds = array<i64: 1, 256>}, {pipeline_mode = #tpu.pipeline_mode<synchronous>, transform_indices = @transform_4, window_bounds = array<i64: 1, 256>}, {pipeline_mode = #tpu.pipeline_mode<synchronous>, transform_indices = @transform_5, window_bounds = array<i64: 256, 8>}, {pipeline_mode = #tpu.pipeline_mode<synchronous>, transform_indices = @transform_6, window_bounds = array<i64: 1, 8>}, {transform_indices = @transform_7, window_bounds = array<i64: 4, 8>}]} {
    %c0 = arith.constant 0 : index
    %c0_0 = arith.constant 0 : index
    %0 = vector.load %arg1[%c0, %c0_0] : memref<4x96xf32, #tpu.memory_space<vmem>>, vector<4x96xf32>
    %c0_1 = arith.constant 0 : index
    %c0_2 = arith.constant 0 : index
    %1 = vector.load %arg2[%c0_1, %c0_2] : memref<96x256xf32, #tpu.memory_space<vmem>>, vector<96x256xf32>
    %cst = arith.constant dense<0.000000e+00> : vector<4x256xf32>
    %2 = tpu.matmul %0, %1, %cst {dimension_numbers = #tpu.dot_dimension_numbers<[1], [0], [0], [1], [0, 0, 1, 1], [], []>} : vector<4x96xf32>, vector<96x256xf32>, vector<4x256xf32> -> vector<4x256xf32>
    %c0_3 = arith.constant 0 : index
    %c0_4 = arith.constant 0 : index
    %3 = vector.load %arg3[%c0_3, %c0_4] : memref<1x256xf32, #tpu.memory_space<vmem>>, vector<1x256xf32>
    %4 = vector.broadcast %3 : vector<1x256xf32> to vector<4x256xf32>
    %5 = arith.addf %2, %4 : vector<4x256xf32>
    %cst_5 = arith.constant 0.000000e+00 : f32
    %6 = vector.broadcast %cst_5 : f32 to vector<4x256xf32>
    %7 = arith.maximumf %5, %6 : vector<4x256xf32>
    %cst_6 = arith.constant dense<0.000000e+00> : vector<4xf32>
    %8 = vector.multi_reduction <add>, %7, %cst_6 [1] : vector<4x256xf32> to vector<4xf32>
    %9 = vector.shape_cast %8 : vector<4xf32> to vector<4x1xf32>
    %10 = arith.mulf %7, %7 : vector<4x256xf32>
    %cst_7 = arith.constant dense<0.000000e+00> : vector<4xf32>
    %11 = vector.multi_reduction <add>, %10, %cst_7 [1] : vector<4x256xf32> to vector<4xf32>
    %12 = vector.shape_cast %11 : vector<4xf32> to vector<4x1xf32>
    %cst_8 = arith.constant 3.906250e-03 : f32
    %13 = vector.broadcast %cst_8 : f32 to vector<4x1xf32>
    %14 = arith.mulf %9, %13 : vector<4x1xf32>
    %cst_9 = arith.constant 3.906250e-03 : f32
    %15 = vector.broadcast %cst_9 : f32 to vector<4x1xf32>
    %16 = arith.mulf %12, %15 : vector<4x1xf32>
    %17 = arith.mulf %14, %14 : vector<4x1xf32>
    %18 = arith.subf %16, %17 : vector<4x1xf32>
    %19 = vector.broadcast %14 : vector<4x1xf32> to vector<4x256xf32>
    %20 = arith.subf %7, %19 : vector<4x256xf32>
    %cst_10 = arith.constant 9.99999974E-6 : f32
    %21 = vector.broadcast %cst_10 : f32 to vector<4x1xf32>
    %22 = arith.addf %18, %21 : vector<4x1xf32>
    %23 = math.rsqrt %22 : vector<4x1xf32>
    %24 = vector.broadcast %23 : vector<4x1xf32> to vector<4x256xf32>
    %25 = arith.mulf %20, %24 : vector<4x256xf32>
    %c0_11 = arith.constant 0 : index
    %c0_12 = arith.constant 0 : index
    %26 = vector.load %arg4[%c0_11, %c0_12] : memref<1x256xf32, #tpu.memory_space<vmem>>, vector<1x256xf32>
    %27 = vector.broadcast %26 : vector<1x256xf32> to vector<4x256xf32>
    %28 = arith.mulf %25, %27 : vector<4x256xf32>
    %c0_13 = arith.constant 0 : index
    %c0_14 = arith.constant 0 : index
    %29 = vector.load %arg5[%c0_13, %c0_14] : memref<1x256xf32, #tpu.memory_space<vmem>>, vector<1x256xf32>
    %30 = vector.broadcast %29 : vector<1x256xf32> to vector<4x256xf32>
    %31 = arith.addf %28, %30 : vector<4x256xf32>
    %c0_15 = arith.constant 0 : index
    %c0_16 = arith.constant 0 : index
    %32 = vector.load %arg6[%c0_15, %c0_16] : memref<256x8xf32, #tpu.memory_space<vmem>>, vector<256x8xf32>
    %cst_17 = arith.constant dense<0.000000e+00> : vector<4x8xf32>
    %33 = tpu.matmul %31, %32, %cst_17 {dimension_numbers = #tpu.dot_dimension_numbers<[1], [0], [0], [1], [0, 0, 1, 1], [], []>} : vector<4x256xf32>, vector<256x8xf32>, vector<4x8xf32> -> vector<4x8xf32>
    %c0_18 = arith.constant 0 : index
    %c0_19 = arith.constant 0 : index
    %34 = vector.load %arg7[%c0_18, %c0_19] : memref<1x8xf32, #tpu.memory_space<vmem>>, vector<1x8xf32>
    %35 = vector.broadcast %34 : vector<1x8xf32> to vector<4x8xf32>
    %36 = arith.addf %33, %35 : vector<4x8xf32>
    %c0_20 = arith.constant 0 : index
    %c0_21 = arith.constant 0 : index
    %37 = vector.load %arg8[%c0_20, %c0_21] : memref<4x8xf32, #tpu.memory_space<vmem>>, vector<4x8xf32>
    tpu.vector_store %arg8[%c0_20, %c0_21], %36 {strides = array<i32>} : memref<4x8xf32, #tpu.memory_space<vmem>>, vector<4x8xf32>,
    return
  }
  func.func @transform_0(%arg0: i32) -> (i32, i32) {
    %c0_i32 = arith.constant 0 : i32
    %c0_i32_0 = arith.constant 0 : i32
    return %arg0, %c0_i32 : i32, i32
  }
  func.func @transform_1(%arg0: i32) -> (i32, i32) {
    %c0_i32 = arith.constant 0 : i32
    %c0_i32_0 = arith.constant 0 : i32
    %c0_i32_1 = arith.constant 0 : i32
    return %c0_i32, %c0_i32_0 : i32, i32
  }
  func.func @transform_2(%arg0: i32) -> (i32, i32) {
    %c0_i32 = arith.constant 0 : i32
    %c0_i32_0 = arith.constant 0 : i32
    %c0_i32_1 = arith.constant 0 : i32
    return %c0_i32, %c0_i32_0 : i32, i32
  }
  func.func @transform_3(%arg0: i32) -> (i32, i32) {
    %c0_i32 = arith.constant 0 : i32
    %c0_i32_0 = arith.constant 0 : i32
    %c0_i32_1 = arith.constant 0 : i32
    return %c0_i32, %c0_i32_0 : i32, i32
  }
  func.func @transform_4(%arg0: i32) -> (i32, i32) {
    %c0_i32 = arith.constant 0 : i32
    %c0_i32_0 = arith.constant 0 : i32
    %c0_i32_1 = arith.constant 0 : i32
    return %c0_i32, %c0_i32_0 : i32, i32
  }
  func.func @transform_5(%arg0: i32) -> (i32, i32) {
    %c0_i32 = arith.constant 0 : i32
    %c0_i32_0 = arith.constant 0 : i32
    %c0_i32_1 = arith.constant 0 : i32
    return %c0_i32, %c0_i32_0 : i32, i32
  }
  func.func @transform_6(%arg0: i32) -> (i32, i32) {
    %c0_i32 = arith.constant 0 : i32
    %c0_i32_0 = arith.constant 0 : i32
    %c0_i32_1 = arith.constant 0 : i32
    return %c0_i32, %c0_i32_0 : i32, i32
  }
  func.func @transform_7(%arg0: i32) -> (i32, i32) {
    %c0_i32 = arith.constant 0 : i32
    %c0_i32_0 = arith.constant 0 : i32
    return %arg0, %c0_i32 : i32, i32
  }
}

</mosaic_0001>

<llo_original>
// kernel: tpu_custom_call.1
$region0: #{tpu_custom_call.1}
  #allocation0 [shape = 'u32[]', space=smem, size = 0x4, offset = 0x4, fixed_abs, tag = 'smem constant byte address 0x4 - core index']
  #allocation1 [shape = 'u32[144,128]{1,0:T(1,128)}', space=vmem, size = 0x12000, scoped, tag = 'internal scratch']
  %s0 = inlined_call_operand.vmem [shape: f32[4,96], index: 0, kind: input, shape index: {}]
  %s1 = inlined_call_operand.vmem [shape: f32[96,256], index: 1, kind: input, shape index: {}]
  %s2 = inlined_call_operand.vmem [shape: f32[1,256], index: 2, kind: input, shape index: {}]
  %s3 = inlined_call_operand.vmem [shape: f32[1,256], index: 3, kind: input, shape index: {}]
  %s4 = inlined_call_operand.vmem [shape: f32[1,256], index: 4, kind: input, shape index: {}]
  %s5 = inlined_call_operand.vmem [shape: f32[256,8], index: 5, kind: input, shape index: {}]
  %s6 = inlined_call_operand.vmem [shape: f32[1,8], index: 6, kind: input, shape index: {}]
  %s7 = inlined_call_operand.hbm [shape: f32[4,8], index: 7, kind: output, shape index: {}]
  %s8 = sld [smem:[#allocation0]]
  $region38: #{tpu_custom_call.1} parent=0
    _
  %s10 = ssub.s32 1, %s8
  %s11 = scalar_select 0, %s10, %s8
  $region1: #{tpu_custom_call.1} parent=0
    #allocation2 [shape = 'u8[2048]{0}', space=vmem, size = 0x800, scoped, tag = 'output window, operand 0, single buffered']
    #allocation3 [shape = 's32[1]{0}', space=sflag, size = 0x4, scoped, tag = 'scoped memory for tpu_custom_call.1']
    %12 = vsyncpa [#allocation3], 0
    // Predicated region
    $region2: #{tpu_custom_call.1} parent=1 // pred_check
      _
    $region3: #{tpu_custom_call.1} parent=1 // pred_check_branch
      %14 = sbr.rel (0) target = $region5
    $region4: #{tpu_custom_call.1} parent=1 // pred_region
      _
    $region5: #{tpu_custom_call.1} parent=1 // pred_fallthru
      _
    // Predicated region
    $region6: #{tpu_custom_call.1} parent=1 // pred_check
      _
    $region7: #{tpu_custom_call.1} parent=1 // pred_check_branch
      %16 = sbr.rel (0) target = $region9
    $region8: #{tpu_custom_call.1} parent=1 // pred_region
      _
    $region9: #{tpu_custom_call.1} parent=1 // pred_fallthru
      _
    // Predicated region
    $region10: #{tpu_custom_call.1} parent=1 // pred_check
      _
    $region11: #{tpu_custom_call.1} parent=1 // pred_check_branch
      %18 = sbr.rel (0) target = $region13
    $region12: #{tpu_custom_call.1} parent=1 // pred_region
      _
    $region13: #{tpu_custom_call.1} parent=1 // pred_fallthru
      _
    // Predicated region
    $region14: #{tpu_custom_call.1} parent=1 // pred_check
      _
    $region15: #{tpu_custom_call.1} parent=1 // pred_check_branch
      %20 = sbr.rel (0) target = $region17
    $region16: #{tpu_custom_call.1} parent=1 // pred_region
      _
    $region17: #{tpu_custom_call.1} parent=1 // pred_fallthru
      _
    // Predicated region
    $region18: #{tpu_custom_call.1} parent=1 // pred_check
      _
    $region19: #{tpu_custom_call.1} parent=1 // pred_check_branch
      %22 = sbr.rel (0) target = $region21
    $region20: #{tpu_custom_call.1} parent=1 // pred_region
      _
    $region21: #{tpu_custom_call.1} parent=1 // pred_fallthru
      _
    // Predicated region
    $region22: #{tpu_custom_call.1} parent=1 // pred_check
      _
    $region23: #{tpu_custom_call.1} parent=1 // pred_check_branch
      %24 = sbr.rel (0) target = $region25
    $region24: #{tpu_custom_call.1} parent=1 // pred_region
      _
    $region25: #{tpu_custom_call.1} parent=1 // pred_fallthru
      _
    // Predicated region
    $region26: #{tpu_custom_call.1} parent=1 // pred_check
      _
    $region27: #{tpu_custom_call.1} parent=1 // pred_check_branch
      %26 = sbr.rel (0) target = $region29
    $region28: #{tpu_custom_call.1} parent=1 // pred_region
      _
    $region29: #{tpu_custom_call.1} parent=1 // pred_fallthru
      _
    %v27 = vld [vmem:[%s0] sm:$0xf]
    %v28 = vld [vmem:[%s1] sm:$0xff]
    %v29 = vld [vmem:[%s1 + $0x8] sm:$0xff]
    %v30 = vld [vmem:[%s1 + $0x10] sm:$0xff]
    %v31 = vld [vmem:[%s1 + $0x18] sm:$0xff]
    %v32 = vld [vmem:[%s1 + $0x20] sm:$0xff]
    %v33 = vld [vmem:[%s1 + $0x28] sm:$0xff]
    %v34 = vld [vmem:[%s1 + $0x30] sm:$0xff]
    %v35 = vld [vmem:[%s1 + $0x38] sm:$0xff]
    %v36 = vld [vmem:[%s1 + $0x40] sm:$0xff]
    %v37 = vld [vmem:[%s1 + $0x48] sm:$0xff]
    %v38 = vld [vmem:[%s1 + $0x50] sm:$0xff]
    %v39 = vld [vmem:[%s1 + $0x58] sm:$0xff]
    %v40 = vld [vmem:[%s1 + $0x60] sm:$0xff]
    %v41 = vld [vmem:[%s1 + $0x68] sm:$0xff]
    %v42 = vld [vmem:[%s1 + $0x70] sm:$0xff]
    %v43 = vld [vmem:[%s1 + $0x78] sm:$0xff]
    %v44 = vld [vmem:[%s1 + $0x80] sm:$0xff]
    %v45 = vld [vmem:[%s1 + $0x88] sm:$0xff]
    %v46 = vld [vmem:[%s1 + $0x90] sm:$0xff]
    %v47 = vld [vmem:[%s1 + $0x98] sm:$0xff]
    %v48 = vld [vmem:[%s1 + $0xa0] sm:$0xff]
    %v49 = vld [vmem:[%s1 + $0xa8] sm:$0xff]
    %v50 = vld [vmem:[%s1 + $0xb0] sm:$0xff]
    %v51 = vld [vmem:[%s1 + $0xb8] sm:$0xff]
    %v52 = vld [vmem:[%s2] sm:$0x3]
    %v54 = vlaneseq
    %v55 = vshrl.u32 %v54, 7
    %v56 = vsub.s32 0, %v55
    %v57 = vrot.slane %v52, %v56
    %v58 = vlaneseq
    %v59 = vshrl.u32 %v58, 7
    %v60 = vsub.s32 1, %v59
    %v61 = vrot.slane %v52, %v60
    %vm64 = vcmask 785408
    %v66 = vsel %vm64, %v27, 0
    %68 = vmatprep.subr.mxu0 %v29
    %69 = vmatpush1.msra.mxu0 %v28
    %70 = vmatprep.subr.mxu0 %v31
    %71 = vmatpush1.msra.mxu0 %v30
    %72 = vmatprep.subr.mxu0 %v33
    %73 = vmatpush1.msra.mxu0 %v32
    %74 = vmatprep.subr.mxu0 %v35
    %75 = vmatpush1.msra.mxu0 %v34
    %76 = vmatprep.subr.mxu0 %v37
    %77 = vmatpush1.msra.mxu0 %v36
    %78 = vmatprep.subr.mxu0 %v39
    %79 = vmatpush1.msra.mxu0 %v38
    %80 = vmatprep.subr.mxu0 %v41
    %81 = vmatpush1.msra.mxu0 %v40
    %82 = vmatprep.subr.mxu0 %v43
    %83 = vmatpush1.msra.mxu0 %v42
    %84 = vmatprep.subr.mxu0 %v45
    %85 = vmatpush1.msra.mxu0 %v44
    %86 = vmatprep.subr.mxu0 %v47
    %87 = vmatpush1.msra.mxu0 %v46
    %88 = vmatprep.subr.mxu0 %v49
    %89 = vmatpush1.msra.mxu0 %v48
    %90 = vmatprep.subr.mxu0 %v51
    %91 = vmatpush1.msra.mxu0 %v50
    %92 = vmatprep.subr.mxu0 0.0
    %93 = vmatpush1.msra.mxu0 0.0
    %94 = vmatprep.subr.mxu0 0.0
    %95 = vmatpush1.msra.mxu0 0.0
    %96 = vmatprep.subr.mxu0 0.0
    %97 = vmatpush1.msra.mxu0 0.0
    %98 = vmatprep.subr.mxu0 0.0
    %99 = vmatpush1.msra.mxu0 0.0
    %100 = vmatprep.subr.mxu0 0.0
    %101 = vmatpush1.msra.mxu0 0.0
    %102 = vmatprep.subr.mxu0 0.0
    %103 = vmatpush1.msra.mxu0 0.0
    %104 = vmatprep.subr.mxu0 0.0
    %105 = vmatpush1.msra.mxu0 0.0
    %106 = vmatprep.subr.mxu0 0.0
    %107 = vmatpush1.msra.mxu0 0.0
    %108 = vmatprep.subr.mxu0 0.0
    %109 = vmatpush1.msra.mxu0 0.0
    %110 = vmatprep.subr.mxu0 0.0
    %111 = vmatpush1.msra.mxu0 0.0
    %112 = vmatprep.subr.mxu0 0.0
    %113 = vmatpush1.msra.mxu0 0.0
    %114 = vmatprep.subr.mxu0 0.0
    %115 = vmatpush1.msra.mxu0 0.0
    %116 = vmatprep.subr.mxu0 0.0
    %117 = vmatpush1.msra.mxu0 0.0
    %118 = vmatprep.subr.mxu0 0.0
    %119 = vmatpush1.msra.mxu0 0.0
    %120 = vmatprep.subr.mxu0 0.0
    %121 = vmatpush1.msra.mxu0 0.0
    %122 = vmatprep.subr.mxu0 0.0
    %123 = vmatpush1.msra.mxu0 0.0
    %124 = vmatprep.subr.mxu0 0.0
    %125 = vmatpush1.msra.mxu0 0.0
    %126 = vmatprep.subr.mxu0 0.0
    %127 = vmatpush1.msra.mxu0 0.0
    %128 = vmatprep.subr.mxu0 0.0
    %129 = vmatpush1.msra.mxu0 0.0
    %130 = vmatprep.subr.mxu0 0.0
    %131 = vmatpush1.msra.mxu0 0.0
    %132 = vmatprep.mubr.f32.mxu0 0.0
    %133 = vmatmul.mubr.f32.gmra.mrb[0].mxu0 %v66
    %v134 = vpop.f32.mrb[0].mxu0
    %v135 = vadd.f32 %v57, %v134
    %v136 = vpop.f32.mrb[0].mxu0
    %v137 = vadd.f32 %v61, %v136
    %138 = vdwg.mxu0
    %v139 = vmax.f32 %v135, 0.0
    %v140 = vmax.f32 %v137, 0.0
    %vm141 = vcmask 1043456
    %v142 = vsel %vm141, %v139, 0.0
    %v143 = vsel %vm141, %v140, 0.0
    %v144 = vadd.f32 %v142, %v143
    %145 = vadd.xlane.f32.xlu0 %v144
    %v146 = vpop.xlane.xlu0 %145
    %v147 = vmul.f32 %v139, %v139
    %v148 = vmul.f32 %v140, %v140
    %v149 = vsel %vm141, %v147, 0.0
    %v150 = vsel %vm141, %v148, 0.0
    %v151 = vadd.f32 %v149, %v150
    %152 = vadd.xlane.f32.xlu0 %v151
    %v153 = vpop.xlane.xlu0 %152
    %v154 = vmul.f32 %v146, 0.00390625
    %v155 = vmul.f32 %v153, 0.00390625
    %v156 = vmul.f32 %v154, %v154
    %v157 = vsub.f32 %v155, %v156
    %v158 = vsub.f32 %v139, %v154
    %v159 = vsub.f32 %v140, %v154
    %v160 = vadd.f32 %v157, 1e-05
    %v161 = vrsqrt.pop %v160
    %v162 = vmul.f32 %v158, %v161
    %v163 = vmul.f32 %v159, %v161
    %v164 = vld [vmem:[%s3] sm:$0x3]
    %v166 = vlaneseq
    %v167 = vshrl.u32 %v166, 7
    %v168 = vsub.s32 0, %v167
    %v169 = vrot.slane %v164, %v168
    %v170 = vlaneseq
    %v171 = vshrl.u32 %v170, 7
    %v172 = vsub.s32 1, %v171
    %v173 = vrot.slane %v164, %v172
    %v176 = vmul.f32 %v162, %v169
    %v177 = vmul.f32 %v163, %v173
    %v178 = vld [vmem:[%s4] sm:$0x3]
    %v180 = vlaneseq
    %v181 = vshrl.u32 %v180, 7
    %v182 = vsub.s32 0, %v181
    %v183 = vrot.slane %v178, %v182
    %v184 = vlaneseq
    %v185 = vshrl.u32 %v184, 7
    %v186 = vsub.s32 1, %v185
    %v187 = vrot.slane %v178, %v186
    %v190 = vadd.f32 %v176, %v183
    %v191 = vadd.f32 %v177, %v187
    %v192 = vld [vmem:[%s5] sm:$0xff]
    %v193 = vld [vmem:[%s5 + $0x8] sm:$0xff]
    %v194 = vld [vmem:[%s5 + $0x10] sm:$0xff]
    %v195 = vld [vmem:[%s5 + $0x18] sm:$0xff]
    %v196 = vld [vmem:[%s5 + $0x20] sm:$0xff]
    %v197 = vld [vmem:[%s5 + $0x28] sm:$0xff]
    %v198 = vld [vmem:[%s5 + $0x30] sm:$0xff]
    %v199 = vld [vmem:[%s5 + $0x38] sm:$0xff]
    %v200 = vld [vmem:[%s5 + $0x40] sm:$0xff]
    %v201 = vld [vmem:[%s5 + $0x48] sm:$0xff]
    %v202 = vld [vmem:[%s5 + $0x50] sm:$0xff]
    %v203 = vld [vmem:[%s5 + $0x58] sm:$0xff]
    %v204 = vld [vmem:[%s5 + $0x60] sm:$0xff]
    %v205 = vld [vmem:[%s5 + $0x68] sm:$0xff]
    %v206 = vld [vmem:[%s5 + $0x70] sm:$0xff]
    %v207 = vld [vmem:[%s5 + $0x78] sm:$0xff]
    %v208 = vld [vmem:[%s5 + $0x80] sm:$0xff]
    %v209 = vld [vmem:[%s5 + $0x88] sm:$0xff]
    %v210 = vld [vmem:[%s5 + $0x90] sm:$0xff]
    %v211 = vld [vmem:[%s5 + $0x98] sm:$0xff]
    %v212 = vld [vmem:[%s5 + $0xa0] sm:$0xff]
    %v213 = vld [vmem:[%s5 + $0xa8] sm:$0xff]
    %v214 = vld [vmem:[%s5 + $0xb0] sm:$0xff]
    %v215 = vld [vmem:[%s5 + $0xb8] sm:$0xff]
    %v216 = vld [vmem:[%s5 + $0xc0] sm:$0xff]
    %v217 = vld [vmem:[%s5 + $0xc8] sm:$0xff]
    %v218 = vld [vmem:[%s5 + $0xd0] sm:$0xff]
    %v219 = vld [vmem:[%s5 + $0xd8] sm:$0xff]
    %v220 = vld [vmem:[%s5 + $0xe0] sm:$0xff]
    %v221 = vld [vmem:[%s5 + $0xe8] sm:$0xff]
    %v222 = vld [vmem:[%s5 + $0xf0] sm:$0xff]
    %v223 = vld [vmem:[%s5 + $0xf8] sm:$0xff]
    %v224 = vld [vmem:[%s6] sm:$0x1]
    %v226 = vlaneseq
    %v227 = vshrl.u32 %v226, 7
    %v228 = vsub.s32 0, %v227
    %v229 = vrot.slane %v224, %v228
    %231 = vmatprep.subr.mxu0 0.0
    %232 = vmatpush1.msra.mxu0 %v192
    %233 = vmatprep.subr.mxu0 0.0
    %234 = vmatpush1.msra.mxu0 %v193
    %235 = vmatprep.subr.mxu0 0.0
    %236 = vmatpush1.msra.mxu0 %v194
    %237 = vmatprep.subr.mxu0 0.0
    %238 = vmatpush1.msra.mxu0 %v195
    %239 = vmatprep.subr.mxu0 0.0
    %240 = vmatpush1.msra.mxu0 %v196
    %241 = vmatprep.subr.mxu0 0.0
    %242 = vmatpush1.msra.mxu0 %v197
    %243 = vmatprep.subr.mxu0 0.0
    %244 = vmatpush1.msra.mxu0 %v198
    %245 = vmatprep.subr.mxu0 0.0
    %246 = vmatpush1.msra.mxu0 %v199
    %247 = vmatprep.subr.mxu0 0.0
    %248 = vmatpush1.msra.mxu0 %v200
    %249 = vmatprep.subr.mxu0 0.0
    %250 = vmatpush1.msra.mxu0 %v201
    %251 = vmatprep.subr.mxu0 0.0
    %252 = vmatpush1.msra.mxu0 %v202
    %253 = vmatprep.subr.mxu0 0.0
    %254 = vmatpush1.msra.mxu0 %v203
    %255 = vmatprep.subr.mxu0 0.0
    %256 = vmatpush1.msra.mxu0 %v204
    %257 = vmatprep.subr.mxu0 0.0
    %258 = vmatpush1.msra.mxu0 %v205
    %259 = vmatprep.subr.mxu0 0.0
    %260 = vmatpush1.msra.mxu0 %v206
    %261 = vmatprep.subr.mxu0 0.0
    %262 = vmatpush1.msra.mxu0 %v207
    %263 = vmatprep.subr.mxu0 0.0
    %264 = vmatpush1.msra.mxu0 %v208
    %265 = vmatprep.subr.mxu0 0.0
    %266 = vmatpush1.msra.mxu0 %v209
    %267 = vmatprep.subr.mxu0 0.0
    %268 = vmatpush1.msra.mxu0 %v210
    %269 = vmatprep.subr.mxu0 0.0
    %270 = vmatpush1.msra.mxu0 %v211
    %271 = vmatprep.subr.mxu0 0.0
    %272 = vmatpush1.msra.mxu0 %v212
    %273 = vmatprep.subr.mxu0 0.0
    %274 = vmatpush1.msra.mxu0 %v213
    %275 = vmatprep.subr.mxu0 0.0
    %276 = vmatpush1.msra.mxu0 %v214
    %277 = vmatprep.subr.mxu0 0.0
    %278 = vmatpush1.msra.mxu0 %v215
    %279 = vmatprep.subr.mxu0 0.0
    %280 = vmatpush1.msra.mxu0 %v216
    %281 = vmatprep.subr.mxu0 0.0
    %282 = vmatpush1.msra.mxu0 %v217
    %283 = vmatprep.subr.mxu0 0.0
    %284 = vmatpush1.msra.mxu0 %v218
    %285 = vmatprep.subr.mxu0 0.0
    %286 = vmatpush1.msra.mxu0 %v219
    %287 = vmatprep.subr.mxu0 0.0
    %288 = vmatpush1.msra.mxu0 %v220
    %289 = vmatprep.subr.mxu0 0.0
    %290 = vmatpush1.msra.mxu0 %v221
    %291 = vmatprep.subr.mxu0 0.0
    %292 = vmatpush1.msra.mxu0 %v222
    %293 = vmatprep.subr.mxu0 0.0
    %294 = vmatpush1.msra.mxu0 %v223
    %295 = vmatprep.mubr.f32.mxu0 %v191
    %296 = vmatmul.mubr.f32.gmra.mrb[0].mxu0 %v190
    %v297 = vpop.f32.mrb[0].mxu0
    %v298 = vadd.f32 %v229, %v297
    %v299 = vpop.f32.mrb[0].mxu0
    %300 = vdwg.mxu0
    %vm301 = vcmask 60416
    %302 = vst.msk [vmem:[#allocation2] sm:$0xf] %vm301, %v298
    // Predicated region
    $region30: #{tpu_custom_call.1} parent=1 // pred_check
      _
    $region31: #{tpu_custom_call.1} parent=1 // pred_check_branch
      %304 = sbr.rel (0) target = $region33
    $region32: #{tpu_custom_call.1} parent=1 // pred_region
      %s306 = ssub.s32 64, 64
      %307 = vsyncadd [#allocation3], %s306
      %s309 = sshll.u32 [#allocation2], 4
      %s310 = int_to_ptr.vmem [resolvable:$true] %s309
      %312 = dma.vmem_to_hbm [thread:$0]  %s310, 64, %s7, [#allocation3]
    $region33: #{tpu_custom_call.1} parent=1 // pred_fallthru
      _
    // Predicated region
    $region34: #{tpu_custom_call.1} parent=1 // pred_check
      _
    $region35: #{tpu_custom_call.1} parent=1 // pred_check_branch
      %314 = sbr.rel (0) target = $region37
    $region36: #{tpu_custom_call.1} parent=1 // pred_region
      %315 = dma.done [#allocation3], 64
    $region37: #{tpu_custom_call.1} parent=1 // pred_fallthru
      _
    %316 = vsyncpa [#allocation3], 1

</llo_original>
